<compile_context>
chip_gen: v7x
topology: tpu7x:2x2x1
jax: 0.10.0
libtpu: 0.0.40
codegen_flags: <defaults>
</compile_context>

<pallas_src>
import jax
import jax.numpy as jnp
from jax.experimental import pallas as pl
from jax.experimental.pallas import tpu as pltpu


def attention_kernel(feat_ref, att2_ref, wf_ref, bf_ref, wa_ref, ba_ref,
                     awf_ref, alpha_ref):
    bB, N, F = feat_ref.shape          # batch tile, pixels, feature dim
    A = wf_ref.shape[1]                # attention dim
    n_pad = alpha_ref.shape[1]         # lane-dense alpha width (multiple of 128)

    feat = feat_ref[...]                                        # (bB, N, F)

    # feature_att(features): one (bB*N, F) @ (F, A) MXU pass per batch tile.
    # F and A are lane-aligned and N is a sublane multiple, so the fold is a
    # cheap re-layout, not a VMEM copy.
    att1 = jnp.dot(feat.reshape(bB * N, F), wf_ref[...],
                   preferred_element_type=jnp.float32)
    att1 = (att1 + bf_ref[...].astype(jnp.float32)).reshape(bB, N, A)

    # PyTorch broadcast of (B, N, A) + (B, A): att2 is indexed by the *pixel*
    # axis (requires N == B), so add the FULL att2 to every batch tile.
    att2 = att2_ref[...].astype(jnp.float32)                    # (N, A)
    s = jnp.maximum(att1 + att2[jnp.newaxis, :, :], 0.0)        # ReLU, (bB, N, A)

    # full_att(.).squeeze(2): contract the attention axis against wa (1, A),
    # plus the scalar bias read from SMEM.
    e = jnp.sum(s * wa_ref[...].astype(jnp.float32)[jnp.newaxis, :, :], axis=-1)
    e = e + ba_ref[0, 0]                                        # (bB, N)

    # softmax over the pixel axis (dim=1 in the PyTorch module).
    m = jnp.max(e, axis=-1, keepdims=True)
    p = jnp.exp(e - m)
    alpha = p / jnp.sum(p, axis=-1, keepdims=True)              # (bB, N), f32

    # Lane-dense store: pad alpha with zeros up to n_pad so the vst is unmasked.
    if n_pad > N:
        alpha_ref[...] = jnp.concatenate(
            [alpha, jnp.zeros((bB, n_pad - N), jnp.float32)], axis=-1)
    else:
        alpha_ref[...] = alpha

    # (features * alpha.unsqueeze(2)).sum(dim=1) as an MXU contraction over N
    # (batched matmul, mirrors the flash-attention einsum pattern).
    alpha_c = alpha.astype(feat.dtype)[:, jnp.newaxis, :]       # (bB, 1, N)
    awf = jnp.einsum('bqn,bnf->bqf', alpha_c, feat,
                     preferred_element_type=jnp.float32)[:, 0, :]
    awf_ref[...] = awf.astype(awf_ref.dtype)


def _pick_batch_tile(B, N, F, itemsize, block_budget_bytes=13 << 20):
    """Largest batch tile that divides B, keeps the (bB, F)/(bB, n_pad) output
    blocks (8,128)-legal (bB == B or bB % 8 == 0), and whose features block
    stays within a v7x-safe VMEM budget (64 MiB physical / 32 MiB scoped)."""
    candidates = [b for b in range(1, B + 1)
                  if B % b == 0 and (b == B or b % 8 == 0)]
    fitting = [b for b in candidates if b * N * F * itemsize <= block_budget_bytes]
    return max(fitting) if fitting else min(candidates)


def attention_pallas(features, hidden, wf, bf, wh, bh, wa, ba):
    B, N, F = features.shape
    A = wf.shape[1]
    assert N == B, "module's `att1 + att2` broadcast requires num_pixels == batch"

    # hidden_att(hidden): a tiny (B, H) @ (H, A) matmul.  It is MXU-starved
    # inside the kernel and (because att2 broadcasts along the pixel axis)
    # every batch tile needs all B rows of it, so hoist it to the wrapper.
    att2 = (hidden.astype(jnp.float32) @ wh.astype(jnp.float32)
            + bh.astype(jnp.float32))                           # (B, A) == (N, A)

    itemsize = jnp.dtype(features.dtype).itemsize
    bB = _pick_batch_tile(B, N, F, itemsize)
    n_pad = pl.cdiv(N, 128) * 128                               # lane-dense alpha
    grid = (B // bB,)

    cost = pl.CostEstimate(
        flops=2 * B * N * F * A + 2 * B * N * A + 2 * B * N * F,
        transcendentals=B * N,
        bytes_accessed=(B * N * F * itemsize                    # features in
                        + (B * A + F * A + 2 * A + 1) * 4       # att2 + params
                        + B * F * itemsize + B * n_pad * 4))    # outputs

    awf, alpha_pad = pl.pallas_call(
        attention_kernel,
        out_shape=(jax.ShapeDtypeStruct((B, F), features.dtype),
                   jax.ShapeDtypeStruct((B, n_pad), jnp.float32)),
        grid=grid,
        in_specs=[
            pl.BlockSpec((bB, N, F), lambda i: (i, 0, 0)),      # features (pipelined)
            pl.BlockSpec((B, A), lambda i: (0, 0)),             # full att2 per tile
            pl.BlockSpec((F, A), lambda i: (0, 0)),             # feature_att.weight.T
            pl.BlockSpec((1, A), lambda i: (0, 0)),             # feature_att.bias
            pl.BlockSpec((1, A), lambda i: (0, 0)),             # full_att.weight
            pl.BlockSpec(memory_space=pltpu.MemorySpace.SMEM),  # full_att.bias (scalar)
        ],
        out_specs=(
            pl.BlockSpec((bB, F), lambda i: (i, 0)),
            pl.BlockSpec((bB, n_pad), lambda i: (i, 0)),
        ),
        compiler_params=pltpu.CompilerParams(
            dimension_semantics=("parallel",)),
        cost_estimate=cost,
    )(features, att2, wf, bf, wa, ba)

    alpha = alpha_pad[:, :N]          # drop lane padding; keep alpha in f32
    return awf, alpha


def attention_ref(features, hidden, wf, bf, wh, bh, wa, ba):
    """Plain-JAX reference replicating the PyTorch forward (incl. broadcast)."""
    B, N, F = features.shape
    A = wf.shape[1]
    att1 = (features.reshape(B * N, F) @ wf + bf).reshape(B, N, A)
    att2 = hidden @ wh + bh                                     # (B, A)
    s = jnp.maximum(att1 + att2[jnp.newaxis, :, :], 0.0)
    e = jnp.sum(s * wa[jnp.newaxis, :, :], axis=-1) + ba[0, 0]  # (B, N)
    alpha = jax.nn.softmax(e, axis=1)
    awf = jnp.sum(features * alpha[:, :, None], axis=1)
    return awf, alpha


if __name__ == "__main__":
    # Small shapes consistent with the forward pass. N must equal B for the
    # module's `att1 + att2` broadcast to be legal (see note above).
    B, N, F, H, A = 8, 8, 128, 32, 128

    key = jax.random.PRNGKey(0)
    kf, kh, k1, k2, k3, k4, k5, k6 = jax.random.split(key, 8)

    features = jax.random.normal(kf, (B, N, F), dtype=jnp.float32)
    hidden = jax.random.normal(kh, (B, H), dtype=jnp.float32)

    # Deterministic parameter init (PyTorch nn.Linear-style uniform bounds),
    # stored pre-transposed as (in_dim, out_dim) for the kernel.
    def uinit(k, shape, fan_in):
        bound = 1.0 / jnp.sqrt(jnp.float32(fan_in))
        return jax.random.uniform(k, shape, jnp.float32, -bound, bound)

    wf = uinit(k1, (F, A), F)          # feature_att.weight.T
    bf = uinit(k2, (1, A), F)          # feature_att.bias
    wh = uinit(k3, (H, A), H)          # hidden_att.weight.T
    bh = uinit(k4, (1, A), H)          # hidden_att.bias
    wa = uinit(k5, (1, A), A)          # full_att.weight  (already (1, A))
    ba = uinit(k6, (1, 1), A)          # full_att.bias

    awf, alpha = attention_pallas(features, hidden, wf, bf, wh, bh, wa, ba)
    jax.block_until_ready((awf, alpha))

    awf_r, alpha_r = attention_ref(features, hidden, wf, bf, wh, bh, wa, ba)
    assert awf.shape == (B, F) and alpha.shape == (B, N)
    assert jnp.allclose(awf, awf_r, atol=1e-4, rtol=1e-4)
    assert jnp.allclose(alpha, alpha_r, atol=1e-5, rtol=1e-5)
    assert jnp.allclose(jnp.sum(alpha, axis=1), 1.0, atol=1e-5)

    print("KERNEL_OK")
</pallas_src>

<mosaic_0001>
module attributes {stable_mosaic.version = 11 : i64} {
  func.func @attention_kernel(%arg0: i32, %arg1: memref<8x8x128xf32, #tpu.memory_space<vmem>>, %arg2: memref<8x128xf32, #tpu.memory_space<vmem>>, %arg3: memref<128x128xf32, #tpu.memory_space<vmem>>, %arg4: memref<1x128xf32, #tpu.memory_space<vmem>>, %arg5: memref<1x128xf32, #tpu.memory_space<vmem>>, %arg6: memref<1x1xf32, #tpu.memory_space<smem>>, %arg7: memref<8x128xf32, #tpu.memory_space<vmem>>, %arg8: memref<8x128xf32, #tpu.memory_space<vmem>>) attributes {dimension_semantics = [#tpu.dimension_semantics<parallel>], iteration_bounds = array<i64: 1>, scalar_prefetch = 0 : i64, scratch_operands = 0 : i64, tpu.core_type = #tpu.core_type<tc>, window_params = [{transform_indices = @transform_0, window_bounds = array<i64: 8, 8, 128>}, {pipeline_mode = #tpu.pipeline_mode<synchronous>, transform_indices = @transform_1, window_bounds = array<i64: 8, 128>}, {pipeline_mode = #tpu.pipeline_mode<synchronous>, transform_indices = @transform_2, window_bounds = array<i64: 128, 128>}, {pipeline_mode = #tpu.pipeline_mode<synchronous>, transform_indices = @transform_3, window_bounds = array<i64: 1, 128>}, {pipeline_mode = #tpu.pipeline_mode<synchronous>, transform_indices = @transform_4, window_bounds = array<i64: 1, 128>}, {transform_indices = @transform_5, window_bounds = array<i64: 1, 1>}, {transform_indices = @transform_6, window_bounds = array<i64: 8, 128>}, {transform_indices = @transform_7, window_bounds = array<i64: 8, 128>}]} {
    %c0 = arith.constant 0 : index
    %c0_0 = arith.constant 0 : index
    %c0_1 = arith.constant 0 : index
    %0 = vector.load %arg1[%c0, %c0_0, %c0_1] : memref<8x8x128xf32, #tpu.memory_space<vmem>>, vector<8x8x128xf32>
    %1 = vector.shape_cast %0 : vector<8x8x128xf32> to vector<64x128xf32>
    %c0_2 = arith.constant 0 : index
    %c0_3 = arith.constant 0 : index
    %2 = vector.load %arg3[%c0_2, %c0_3] : memref<128x128xf32, #tpu.memory_space<vmem>>, vector<128x128xf32>
    %cst = arith.constant dense<0.000000e+00> : vector<64x128xf32>
    %3 = tpu.matmul %1, %2, %cst {dimension_numbers = #tpu.dot_dimension_numbers<[1], [0], [0], [1], [0, 0, 1, 1], [], []>} : vector<64x128xf32>, vector<128x128xf32>, vector<64x128xf32> -> vector<64x128xf32>
    %c0_4 = arith.constant 0 : index
    %c0_5 = arith.constant 0 : index
    %4 = vector.load %arg4[%c0_4, %c0_5] : memref<1x128xf32, #tpu.memory_space<vmem>>, vector<1x128xf32>
    %5 = vector.broadcast %4 : vector<1x128xf32> to vector<64x128xf32>
    %6 = arith.addf %3, %5 : vector<64x128xf32>
    %7 = vector.shape_cast %6 : vector<64x128xf32> to vector<8x8x128xf32>
    %c0_6 = arith.constant 0 : index
    %c0_7 = arith.constant 0 : index
    %8 = vector.load %arg2[%c0_6, %c0_7] : memref<8x128xf32, #tpu.memory_space<vmem>>, vector<8x128xf32>
    %9 = vector.shape_cast %8 : vector<8x128xf32> to vector<1x8x128xf32>
    %10 = vector.broadcast %9 : vector<1x8x128xf32> to vector<8x8x128xf32>
    %11 = arith.addf %7, %10 : vector<8x8x128xf32>
    %cst_8 = arith.constant 0.000000e+00 : f32
    %12 = vector.broadcast %cst_8 : f32 to vector<8x8x128xf32>
    %13 = arith.maximumf %11, %12 : vector<8x8x128xf32>
    %c0_9 = arith.constant 0 : index
    %c0_10 = arith.constant 0 : index
    %14 = vector.load %arg5[%c0_9, %c0_10] : memref<1x128xf32, #tpu.memory_space<vmem>>, vector<1x128xf32>
    %15 = vector.shape_cast %14 : vector<1x128xf32> to vector<1x1x128xf32>
    %16 = vector.broadcast %15 : vector<1x1x128xf32> to vector<8x8x128xf32>
    %17 = arith.mulf %13, %16 : vector<8x8x128xf32>
    %cst_11 = arith.constant dense<0.000000e+00> : vector<8x8xf32>
    %18 = vector.multi_reduction <add>, %17, %cst_11 [2] : vector<8x8x128xf32> to vector<8x8xf32>
    %c0_12 = arith.constant 0 : index
    %c0_13 = arith.constant 0 : index
    %19 = memref.load %arg6[%c0_12, %c0_13] : memref<1x1xf32, #tpu.memory_space<smem>>
    %20 = vector.broadcast %19 : f32 to vector<8x8xf32>
    %21 = arith.addf %18, %20 : vector<8x8xf32>
    %cst_14 = arith.constant dense<0xFF800000> : vector<8xf32>
    %22 = vector.multi_reduction <maximumf>, %21, %cst_14 [1] : vector<8x8xf32> to vector<8xf32>
    %23 = vector.shape_cast %22 : vector<8xf32> to vector<8x1xf32>
    %24 = vector.broadcast %23 : vector<8x1xf32> to vector<8x8xf32>
    %25 = arith.subf %21, %24 : vector<8x8xf32>
    %26 = math.exp %25 : vector<8x8xf32>
    %cst_15 = arith.constant dense<0.000000e+00> : vector<8xf32>
    %27 = vector.multi_reduction <add>, %26, %cst_15 [1] : vector<8x8xf32> to vector<8xf32>
    %28 = vector.shape_cast %27 : vector<8xf32> to vector<8x1xf32>
    %29 = vector.broadcast %28 : vector<8x1xf32> to vector<8x8xf32>
    %30 = arith.divf %26, %29 : vector<8x8xf32>
    %cst_16 = arith.constant 0.000000e+00 : f32
    %31 = vector.broadcast %cst_16 : f32 to vector<8x120xf32>
    %32 = tpu.concatenate %30, %31 in 1 : vector<8x8xf32>, vector<8x120xf32> -> vector<8x128xf32>
    %c0_17 = arith.constant 0 : index
    %c0_18 = arith.constant 0 : index
    %33 = vector.load %arg8[%c0_17, %c0_18] : memref<8x128xf32, #tpu.memory_space<vmem>>, vector<8x128xf32>
    tpu.vector_store %arg8[%c0_17, %c0_18], %32 {strides = array<i32>} : memref<8x128xf32, #tpu.memory_space<vmem>>, vector<8x128xf32>,
    %34 = vector.shape_cast %30 : vector<8x8xf32> to vector<8x1x8xf32>
    "tpu.trace_start"() <{level = 10 : i32, message = "bqn,bnf->bqf"}> : () -> ()
    %cst_19 = arith.constant dense<0.000000e+00> : vector<8x1x128xf32>
    %35 = tpu.matmul %34, %0, %cst_19 {dimension_numbers = #tpu.dot_dimension_numbers<[2], [1], [1], [2], [0, 0, 0, 1, 1, 2], [0], [0]>} : vector<8x1x8xf32>, vector<8x8x128xf32>, vector<8x1x128xf32> -> vector<8x1x128xf32>
    "tpu.trace_stop"() : () -> ()
    %36 = vector.shape_cast %35 : vector<8x1x128xf32> to vector<8x128xf32>
    %c0_20 = arith.constant 0 : index
    %c0_21 = arith.constant 0 : index
    %37 = vector.load %arg7[%c0_20, %c0_21] : memref<8x128xf32, #tpu.memory_space<vmem>>, vector<8x128xf32>
    tpu.vector_store %arg7[%c0_20, %c0_21], %36 {strides = array<i32>} : memref<8x128xf32, #tpu.memory_space<vmem>>, vector<8x128xf32>,
    return
  }
  func.func @transform_0(%arg0: i32) -> (i32, i32, i32) {
    %c0_i32 = arith.constant 0 : i32
    %c0_i32_0 = arith.constant 0 : i32
    %c0_i32_1 = arith.constant 0 : i32
    return %arg0, %c0_i32, %c0_i32_0 : i32, i32, i32
  }
  func.func @transform_1(%arg0: i32) -> (i32, i32) {
    %c0_i32 = arith.constant 0 : i32
    %c0_i32_0 = arith.constant 0 : i32
    %c0_i32_1 = arith.constant 0 : i32
    return %c0_i32, %c0_i32_0 : i32, i32
  }
  func.func @transform_2(%arg0: i32) -> (i32, i32) {
    %c0_i32 = arith.constant 0 : i32
    %c0_i32_0 = arith.constant 0 : i32
    %c0_i32_1 = arith.constant 0 : i32
    return %c0_i32, %c0_i32_0 : i32, i32
  }
  func.func @transform_3(%arg0: i32) -> (i32, i32) {
    %c0_i32 = arith.constant 0 : i32
    %c0_i32_0 = arith.constant 0 : i32
    %c0_i32_1 = arith.constant 0 : i32
    return %c0_i32, %c0_i32_0 : i32, i32
  }
  func.func @transform_4(%arg0: i32) -> (i32, i32) {
    %c0_i32 = arith.constant 0 : i32
    %c0_i32_0 = arith.constant 0 : i32
    %c0_i32_1 = arith.constant 0 : i32
    return %c0_i32, %c0_i32_0 : i32, i32
  }
  func.func @transform_5(%arg0: i32) -> (i32, i32) {
    %c0_i32 = arith.constant 0 : i32
    %c0_i32_0 = arith.constant 0 : i32
    %c0_i32_1 = arith.constant 0 : i32
    return %c0_i32, %c0_i32_0 : i32, i32
  }
  func.func @transform_6(%arg0: i32) -> (i32, i32) {
    %c0_i32 = arith.constant 0 : i32
    %c0_i32_0 = arith.constant 0 : i32
    return %arg0, %c0_i32 : i32, i32
  }
  func.func @transform_7(%arg0: i32) -> (i32, i32) {
    %c0_i32 = arith.constant 0 : i32
    %c0_i32_0 = arith.constant 0 : i32
    return %arg0, %c0_i32 : i32, i32
  }
}

</mosaic_0001>

<llo_original>
// kernel: tpu_custom_call.1
$region0: #{tpu_custom_call.1}
  #allocation0 [shape = 'u32[]', space=smem, size = 0x4, offset = 0x4, fixed_abs, tag = 'smem constant byte address 0x4 - core index']
  #allocation1 [shape = 'u32[144,128]{1,0:T(1,128)}', space=vmem, size = 0x12000, scoped, tag = 'internal scratch']
  #allocation2 [shape = 'f32[1,1]{1,0:T(1,128)S(6)}', space=smem, size = 0x200, scoped, tag = 'scoped memory for tpu_custom_call.1']
  %s0 = inlined_call_operand.hbm [shape: f32[8,8,128], index: 0, kind: input, shape index: {}]
  %s1 = inlined_call_operand.hbm [shape: f32[8,128], index: 1, kind: input, shape index: {}]
  %s2 = inlined_call_operand.hbm [shape: f32[128,128], index: 2, kind: input, shape index: {}]
  %s3 = inlined_call_operand.vmem [shape: f32[1,128], index: 3, kind: input, shape index: {}]
  %s4 = inlined_call_operand.vmem [shape: f32[1,128], index: 4, kind: input, shape index: {}]
  %s5 = inlined_call_operand.<no memory space> [shape: f32[1,1], index: 5, kind: input, shape index: {}]
  %s6 = inlined_call_operand.hbm [shape: f32[8,128], index: 6, kind: output, shape index: {0}]
  %s7 = inlined_call_operand.hbm [shape: f32[8,128], index: 7, kind: output, shape index: {1}]
  %8 = xla_tuple %s6, %s7
  %s9 = sld [smem:[#allocation0]]
  $region54: #{tpu_custom_call.1} parent=0
    _
  %s11 = ssub.s32 1, %s9
  %s12 = scalar_select 0, %s11, %s9
  %13 = sst [smem:[#allocation2]] %s5
  $region1: #{tpu_custom_call.1} parent=0
    #allocation3 [shape = 'u8[32768]{0}', space=vmem, size = 0x8000, scoped, tag = 'input window, operand 0, single buffered']
    #allocation4 [shape = 's32[1]{0}', space=sflag, size = 0x4, scoped, tag = 'scoped memory for tpu_custom_call.1']
    #allocation5 [shape = 's32[1]{0}', space=sflag, size = 0x4, scoped, tag = 'scoped memory for tpu_custom_call.1']
    #allocation6 [shape = 'u8[4096]{0}', space=vmem, size = 0x1000, scoped, tag = 'input window, operand 1, single buffered']
    #allocation7 [shape = 's32[1]{0}', space=sflag, size = 0x4, scoped, tag = 'scoped memory for tpu_custom_call.1']
    #allocation8 [shape = 'u8[65536]{0}', space=vmem, size = 0x10000, scoped, tag = 'input window, operand 2, single buffered']
    #allocation9 [shape = 'u8[4096]{0}', space=vmem, size = 0x1000, scoped, tag = 'output window, operand 0, single buffered']
    #allocation10 [shape = 'u8[4096]{0}', space=vmem, size = 0x1000, scoped, tag = 'output window, operand 1, single buffered']
    #allocation11 [shape = 's32[1]{0}', space=sflag, size = 0x4, scoped, tag = 'scoped memory for tpu_custom_call.1']
    %14 = vsyncpa [#allocation4], 0
    %15 = vsyncpa [#allocation7], 0
    %16 = vsyncpa [#allocation5], 0
    %17 = vsyncpa [#allocation11], 0
    // Predicated region
    $region2: #{tpu_custom_call.1} parent=1 // pred_check
      _
    $region3: #{tpu_custom_call.1} parent=1 // pred_check_branch
      %19 = sbr.rel (0) target = $region5
    $region4: #{tpu_custom_call.1} parent=1 // pred_region
      %s21 = ssub.s32 1024, 1024
      %22 = vsyncadd [#allocation4], %s21
      %s23 = sshll.u32 [#allocation3], 4
      %s24 = int_to_ptr.vmem [resolvable:$true] %s23
      %29 = dma.hbm_to_vmem [thread:$0]  %s0, 1024, %s24, [#allocation4], 128, 128, 8
    $region5: #{tpu_custom_call.1} parent=1 // pred_fallthru
      _
    // Predicated region
    $region6: #{tpu_custom_call.1} parent=1 // pred_check
      _
    $region7: #{tpu_custom_call.1} parent=1 // pred_check_branch
      %31 = sbr.rel (0) target = $region9
    $region8: #{tpu_custom_call.1} parent=1 // pred_region
      %s33 = ssub.s32 128, 128
      %34 = vsyncadd [#allocation7], %s33
      %s36 = sshll.u32 [#allocation6], 4
      %s37 = int_to_ptr.vmem [resolvable:$true] %s36
      %39 = dma.hbm_to_vmem [thread:$0]  %s1, 128, %s37, [#allocation7]
    $region9: #{tpu_custom_call.1} parent=1 // pred_fallthru
      _
    // Predicated region
    $region10: #{tpu_custom_call.1} parent=1 // pred_check
      _
    $region11: #{tpu_custom_call.1} parent=1 // pred_check_branch
      %41 = sbr.rel (0) target = $region13
    $region12: #{tpu_custom_call.1} parent=1 // pred_region
      %s43 = ssub.s32 2048, 2048
      %44 = vsyncadd [#allocation7], %s43
      %s45 = sshll.u32 [#allocation8], 4
      %s46 = int_to_ptr.vmem [resolvable:$true] %s45
      %51 = dma.hbm_to_vmem [thread:$0]  %s2, 2048, %s46, [#allocation7], 128, 128, 8
    $region13: #{tpu_custom_call.1} parent=1 // pred_fallthru
      _
    // Predicated region
    $region14: #{tpu_custom_call.1} parent=1 // pred_check
      _
    $region15: #{tpu_custom_call.1} parent=1 // pred_check_branch
      %53 = sbr.rel (0) target = $region17
    $region16: #{tpu_custom_call.1} parent=1 // pred_region
      _
    $region17: #{tpu_custom_call.1} parent=1 // pred_fallthru
      _
    // Predicated region
    $region18: #{tpu_custom_call.1} parent=1 // pred_check
      _
    $region19: #{tpu_custom_call.1} parent=1 // pred_check_branch
      %55 = sbr.rel (0) target = $region21
    $region20: #{tpu_custom_call.1} parent=1 // pred_region
      _
    $region21: #{tpu_custom_call.1} parent=1 // pred_fallthru
      _
    // Predicated region
    $region22: #{tpu_custom_call.1} parent=1 // pred_check
      _
    $region23: #{tpu_custom_call.1} parent=1 // pred_check_branch
      %57 = sbr.rel (0) target = $region25
    $region24: #{tpu_custom_call.1} parent=1 // pred_region
      _
    $region25: #{tpu_custom_call.1} parent=1 // pred_fallthru
      _
    // Predicated region
    $region26: #{tpu_custom_call.1} parent=1 // pred_check
      _
    $region27: #{tpu_custom_call.1} parent=1 // pred_check_branch
      %59 = sbr.rel (0) target = $region29
    $region28: #{tpu_custom_call.1} parent=1 // pred_region
      %60 = dma.done [#allocation4], 1024
    $region29: #{tpu_custom_call.1} parent=1 // pred_fallthru
      _
    // Predicated region
    $region30: #{tpu_custom_call.1} parent=1 // pred_check
      _
    $region31: #{tpu_custom_call.1} parent=1 // pred_check_branch
      %62 = sbr.rel (0) target = $region33
    $region32: #{tpu_custom_call.1} parent=1 // pred_region
      %63 = dma.done [#allocation7], 128
    $region33: #{tpu_custom_call.1} parent=1 // pred_fallthru
      _
    // Predicated region
    $region34: #{tpu_custom_call.1} parent=1 // pred_check
      _
    $region35: #{tpu_custom_call.1} parent=1 // pred_check_branch
      %65 = sbr.rel (0) target = $region37
    $region36: #{tpu_custom_call.1} parent=1 // pred_region
      %66 = dma.done [#allocation7], 2048
    $region37: #{tpu_custom_call.1} parent=1 // pred_fallthru
      _
    %v67 = vld [vmem:[#allocation3] sm:$0xff]
    %v68 = vld [vmem:[#allocation3 + $0x8] sm:$0xff]
    %v69 = vld [vmem:[#allocation3 + $0x10] sm:$0xff]
    %v70 = vld [vmem:[#allocation3 + $0x18] sm:$0xff]
    %v71 = vld [vmem:[#allocation3 + $0x20] sm:$0xff]
    %v72 = vld [vmem:[#allocation3 + $0x28] sm:$0xff]
    %v73 = vld [vmem:[#allocation3 + $0x30] sm:$0xff]
    %v74 = vld [vmem:[#allocation3 + $0x38] sm:$0xff]
    %v75 = vld [vmem:[#allocation8] sm:$0xff]
    %v76 = vld [vmem:[#allocation8 + $0x8] sm:$0xff]
    %v77 = vld [vmem:[#allocation8 + $0x10] sm:$0xff]
    %v78 = vld [vmem:[#allocation8 + $0x18] sm:$0xff]
    %v79 = vld [vmem:[#allocation8 + $0x20] sm:$0xff]
    %v80 = vld [vmem:[#allocation8 + $0x28] sm:$0xff]
    %v81 = vld [vmem:[#allocation8 + $0x30] sm:$0xff]
    %v82 = vld [vmem:[#allocation8 + $0x38] sm:$0xff]
    %v83 = vld [vmem:[#allocation8 + $0x40] sm:$0xff]
    %v84 = vld [vmem:[#allocation8 + $0x48] sm:$0xff]
    %v85 = vld [vmem:[#allocation8 + $0x50] sm:$0xff]
    %v86 = vld [vmem:[#allocation8 + $0x58] sm:$0xff]
    %v87 = vld [vmem:[#allocation8 + $0x60] sm:$0xff]
    %v88 = vld [vmem:[#allocation8 + $0x68] sm:$0xff]
    %v89 = vld [vmem:[#allocation8 + $0x70] sm:$0xff]
    %v90 = vld [vmem:[#allocation8 + $0x78] sm:$0xff]
    %v91 = vld [vmem:[%s3] sm:$0x1]
    %v93 = vlaneseq
    %v94 = vshrl.u32 %v93, 7
    %v95 = vsub.s32 0, %v94
    %v96 = vrot.slane %v91, %v95
    %98 = vmatprep.subr.mxu0 0.0
    %99 = vmatpush1.msra.mxu0 %v75
    %100 = vmatprep.subr.mxu0 0.0
    %101 = vmatpush1.msra.mxu0 %v76
    %102 = vmatprep.subr.mxu0 0.0
    %103 = vmatpush1.msra.mxu0 %v77
    %104 = vmatprep.subr.mxu0 0.0
    %105 = vmatpush1.msra.mxu0 %v78
    %106 = vmatprep.subr.mxu0 0.0
    %107 = vmatpush1.msra.mxu0 %v79
    %108 = vmatprep.subr.mxu0 0.0
    %109 = vmatpush1.msra.mxu0 %v80
    %110 = vmatprep.subr.mxu0 0.0
    %111 = vmatpush1.msra.mxu0 %v81
    %112 = vmatprep.subr.mxu0 0.0
    %113 = vmatpush1.msra.mxu0 %v82
    %114 = vmatprep.subr.mxu0 0.0
    %115 = vmatpush1.msra.mxu0 %v83
    %116 = vmatprep.subr.mxu0 0.0
    %117 = vmatpush1.msra.mxu0 %v84
    %118 = vmatprep.subr.mxu0 0.0
    %119 = vmatpush1.msra.mxu0 %v85
    %120 = vmatprep.subr.mxu0 0.0
    %121 = vmatpush1.msra.mxu0 %v86
    %122 = vmatprep.subr.mxu0 0.0
    %123 = vmatpush1.msra.mxu0 %v87
    %124 = vmatprep.subr.mxu0 0.0
    %125 = vmatpush1.msra.mxu0 %v88
    %126 = vmatprep.subr.mxu0 0.0
    %127 = vmatpush1.msra.mxu0 %v89
    %128 = vmatprep.subr.mxu0 0.0
    %129 = vmatpush1.msra.mxu0 %v90
    %130 = vmatprep.subr.mxu0 0.0
    %131 = vmatpush1.msra.mxu0 0.0
    %132 = vmatprep.subr.mxu0 0.0
    %133 = vmatpush1.msra.mxu0 0.0
    %134 = vmatprep.subr.mxu0 0.0
    %135 = vmatpush1.msra.mxu0 0.0
    %136 = vmatprep.subr.mxu0 0.0
    %137 = vmatpush1.msra.mxu0 0.0
    %138 = vmatprep.subr.mxu0 0.0
    %139 = vmatpush1.msra.mxu0 0.0
    %140 = vmatprep.subr.mxu0 0.0
    %141 = vmatpush1.msra.mxu0 0.0
    %142 = vmatprep.subr.mxu0 0.0
    %143 = vmatpush1.msra.mxu0 0.0
    %144 = vmatprep.subr.mxu0 0.0
    %145 = vmatpush1.msra.mxu0 0.0
    %146 = vmatprep.subr.mxu0 0.0
    %147 = vmatpush1.msra.mxu0 0.0
    %148 = vmatprep.subr.mxu0 0.0
    %149 = vmatpush1.msra.mxu0 0.0
    %150 = vmatprep.subr.mxu0 0.0
    %151 = vmatpush1.msra.mxu0 0.0
    %152 = vmatprep.subr.mxu0 0.0
    %153 = vmatpush1.msra.mxu0 0.0
    %154 = vmatprep.subr.mxu0 0.0
    %155 = vmatpush1.msra.mxu0 0.0
    %156 = vmatprep.subr.mxu0 0.0
    %157 = vmatpush1.msra.mxu0 0.0
    %158 = vmatprep.subr.mxu0 0.0
    %159 = vmatpush1.msra.mxu0 0.0
    %160 = vmatprep.subr.mxu0 0.0
    %161 = vmatpush1.msra.mxu0 0.0
    %162 = vmatprep.mubr.f32.mxu0 0.0
    %163 = vmatmul.mubr.f32.gmra.mrb[0].mxu0 %v67
    %v164 = vpop.f32.mrb[0].mxu0
    %v165 = vadd.f32 %v96, %v164
    %v166 = vpop.f32.mrb[0].mxu0
    %167 = vmatprep.mubr.f32.mxu0 0.0
    %168 = vmatmul.mubr.f32.gmra.mrb[0].mxu0 %v68
    %v169 = vpop.f32.mrb[0].mxu0
    %v170 = vadd.f32 %v96, %v169
    %v171 = vpop.f32.mrb[0].mxu0
    %172 = vmatprep.mubr.f32.mxu0 0.0
    %173 = vmatmul.mubr.f32.gmra.mrb[0].mxu0 %v69
    %v174 = vpop.f32.mrb[0].mxu0
    %v175 = vadd.f32 %v96, %v174
    %v176 = vpop.f32.mrb[0].mxu0
    %177 = vmatprep.mubr.f32.mxu0 0.0
    %178 = vmatmul.mubr.f32.gmra.mrb[0].mxu0 %v70
    %v179 = vpop.f32.mrb[0].mxu0
    %v180 = vadd.f32 %v96, %v179
    %v181 = vpop.f32.mrb[0].mxu0
    %182 = vmatprep.mubr.f32.mxu0 0.0
    %183 = vmatmul.mubr.f32.gmra.mrb[0].mxu0 %v71
    %v184 = vpop.f32.mrb[0].mxu0
    %v185 = vadd.f32 %v96, %v184
    %v186 = vpop.f32.mrb[0].mxu0
    %187 = vmatprep.mubr.f32.mxu0 0.0
    %188 = vmatmul.mubr.f32.gmra.mrb[0].mxu0 %v72
    %v189 = vpop.f32.mrb[0].mxu0
    %v190 = vadd.f32 %v96, %v189
    %v191 = vpop.f32.mrb[0].mxu0
    %192 = vmatprep.mubr.f32.mxu0 0.0
    %193 = vmatmul.mubr.f32.gmra.mrb[0].mxu0 %v73
    %v194 = vpop.f32.mrb[0].mxu0
    %v195 = vadd.f32 %v96, %v194
    %v196 = vpop.f32.mrb[0].mxu0
    %197 = vmatprep.mubr.f32.mxu0 0.0
    %198 = vmatmul.mubr.f32.gmra.mrb[0].mxu0 %v74
    %v199 = vpop.f32.mrb[0].mxu0
    %v200 = vadd.f32 %v96, %v199
    %v201 = vpop.f32.mrb[0].mxu0
    %202 = vdwg.mxu0
    %v203 = vld [vmem:[#allocation6] sm:$0xff]
    %v204 = vadd.f32 %v165, %v203
    %v205 = vadd.f32 %v170, %v203
    %v206 = vadd.f32 %v175, %v203
    %v207 = vadd.f32 %v180, %v203
    %v208 = vadd.f32 %v185, %v203
    %v209 = vadd.f32 %v190, %v203
    %v210 = vadd.f32 %v195, %v203
    %v211 = vadd.f32 %v200, %v203
    %v212 = vmax.f32 %v204, 0.0
    %v213 = vmax.f32 %v205, 0.0
    %v214 = vmax.f32 %v206, 0.0
    %v215 = vmax.f32 %v207, 0.0
    %v216 = vmax.f32 %v208, 0.0
    %v217 = vmax.f32 %v209, 0.0
    %v218 = vmax.f32 %v210, 0.0
    %v219 = vmax.f32 %v211, 0.0
    %v220 = vld [vmem:[%s4] sm:$0x1]
    %v222 = vlaneseq
    %v223 = vshrl.u32 %v222, 7
    %v224 = vsub.s32 0, %v223
    %v225 = vrot.slane %v220, %v224
    %v227 = vmul.f32 %v212, %v225
    %v228 = vmul.f32 %v213, %v225
    %v229 = vmul.f32 %v214, %v225
    %v230 = vmul.f32 %v215, %v225
    %v231 = vmul.f32 %v216, %v225
    %v232 = vmul.f32 %v217, %v225
    %v233 = vmul.f32 %v218, %v225
    %v234 = vmul.f32 %v219, %v225
    %235 = vadd.xlane.f32.xlu0 %v227
    %v236 = vpop.xlane.xlu0 %235
    %237 = vadd.xlane.f32.xlu0 %v228
    %v238 = vpop.xlane.xlu0 %237
    %239 = vadd.xlane.f32.xlu0 %v229
    %v240 = vpop.xlane.xlu0 %239
    %241 = vadd.xlane.f32.xlu0 %v230
    %v242 = vpop.xlane.xlu0 %241
    %243 = vadd.xlane.f32.xlu0 %v231
    %v244 = vpop.xlane.xlu0 %243
    %245 = vadd.xlane.f32.xlu0 %v232
    %v246 = vpop.xlane.xlu0 %245
    %247 = vadd.xlane.f32.xlu0 %v233
    %v248 = vpop.xlane.xlu0 %247
    %249 = vadd.xlane.f32.xlu0 %v234
    %v250 = vpop.xlane.xlu0 %249
    %s251 = sld [smem:[#allocation2]]
    %v252 = vstv %s251
    %v253 = vadd.f32 %v236, %v252
    %v254 = vadd.f32 %v238, %v252
    %v255 = vadd.f32 %v240, %v252
    %v256 = vadd.f32 %v242, %v252
    %v257 = vadd.f32 %v244, %v252
    %v258 = vadd.f32 %v246, %v252
    %v259 = vadd.f32 %v248, %v252
    %v260 = vadd.f32 %v250, %v252
    %v269 = vlaneseq
    %v270 = vand.u32 %v269, 127
    %v271 = vlaneseq
    %v272 = vshrl.u32 %v271, 7
    %v273 = vsub.s32 %v270, %v272
    %v274 = vrot.slane %v253, %v273
    %v275 = vlaneseq
    %v276 = vshrl.u32 %v275, 7
    %v277 = vsub.s32 %v270, %v276
    %v278 = vrot.slane %v254, %v277
    %v279 = vlaneseq
    %v280 = vshrl.u32 %v279, 7
    %v281 = vsub.s32 %v270, %v280
    %v282 = vrot.slane %v255, %v281
    %v283 = vlaneseq
    %v284 = vshrl.u32 %v283, 7
    %v285 = vsub.s32 %v270, %v284
    %v286 = vrot.slane %v256, %v285
    %v287 = vlaneseq
    %v288 = vshrl.u32 %v287, 7
    %v289 = vsub.s32 %v270, %v288
    %v290 = vrot.slane %v257, %v289
    %v291 = vlaneseq
    %v292 = vshrl.u32 %v291, 7
    %v293 = vsub.s32 %v270, %v292
    %v294 = vrot.slane %v258, %v293
    %v295 = vlaneseq
    %v296 = vshrl.u32 %v295, 7
    %v297 = vsub.s32 %v270, %v296
    %v298 = vrot.slane %v259, %v297
    %v299 = vlaneseq
    %v300 = vshrl.u32 %v299, 7
    %v301 = vsub.s32 %v270, %v300
    %v302 = vrot.slane %v260, %v301
    %vm303 = vcmask 1041409
    %v304 = vsel %vm303, %v278, %v274
    %vm305 = vcmask 1042434
    %v306 = vsel %vm305, %v282, %v304
    %vm307 = vcmask 1043459
    %v308 = vsel %vm307, %v286, %v306
    %vm309 = vcmask 1044484
    %v310 = vsel %vm309, %v290, %v308
    %vm311 = vcmask 1045509
    %v312 = vsel %vm311, %v294, %v310
    %vm313 = vcmask 1046534
    %v314 = vsel %vm313, %v298, %v312
    %vm315 = vcmask 1047559
    %v316 = vsel %vm315, %v302, %v314
    %vm318 = vcmask 64512
    %v319 = vsel %vm318, %v316, -inf
    %320 = vmax.xlane.f32.xlu0 %v319
    %v321 = vpop.xlane.xlu0 %320
    %v323 = vlaneseq
    %v324 = vshrl.u32 %v323, 7
    %v325 = vsub.s32 0, %v324
    %v326 = vrot.slane %v321, %v325
    %v327 = vlaneseq
    %v328 = vshrl.u32 %v327, 7
    %v329 = vsub.s32 1, %v328
    %v330 = vrot.slane %v321, %v329
    %v331 = vlaneseq
    %v332 = vshrl.u32 %v331, 7
    %v333 = vsub.s32 2, %v332
    %v334 = vrot.slane %v321, %v333
    %v335 = vlaneseq
    %v336 = vshrl.u32 %v335, 7
    %v337 = vsub.s32 3, %v336
    %v338 = vrot.slane %v321, %v337
    %v339 = vlaneseq
    %v340 = vshrl.u32 %v339, 7
    %v341 = vsub.s32 4, %v340
    %v342 = vrot.slane %v321, %v341
    %v343 = vlaneseq
    %v344 = vshrl.u32 %v343, 7
    %v345 = vsub.s32 5, %v344
    %v346 = vrot.slane %v321, %v345
    %v347 = vlaneseq
    %v348 = vshrl.u32 %v347, 7
    %v349 = vsub.s32 6, %v348
    %v350 = vrot.slane %v321, %v349
    %v351 = vlaneseq
    %v352 = vshrl.u32 %v351, 7
    %v353 = vsub.s32 7, %v352
    %v354 = vrot.slane %v321, %v353
    %v363 = vsub.f32 %v253, %v326
    %v364 = vsub.f32 %v254, %v330
    %v365 = vsub.f32 %v255, %v334
    %v366 = vsub.f32 %v256, %v338
    %v367 = vsub.f32 %v257, %v342
    %v368 = vsub.f32 %v258, %v346
    %v369 = vsub.f32 %v259, %v350
    %v370 = vsub.f32 %v260, %v354
    %v371 = vmul.f32 %v363, 1.442695
    %v372 = vpow.pop %v371
    %v373 = vmul.f32 %v364, 1.442695
    %v374 = vpow.pop %v373
    %v375 = vmul.f32 %v365, 1.442695
    %v376 = vpow.pop %v375
    %v377 = vmul.f32 %v366, 1.442695
    %v378 = vpow.pop %v377
    %v379 = vmul.f32 %v367, 1.442695
    %v380 = vpow.pop %v379
    %v381 = vmul.f32 %v368, 1.442695
    %v382 = vpow.pop %v381
    %v383 = vmul.f32 %v369, 1.442695
    %v384 = vpow.pop %v383
    %v385 = vmul.f32 %v370, 1.442695
    %v386 = vpow.pop %v385
    %395 = vset.pattern.permute.xlu0 0
    %396 = vperm.xlu0 %395, %v372
    %v397 = vpop.permute.xlu0 %396
    %398 = vset.pattern.permute.xlu0 0
    %399 = vperm.xlu0 %398, %v374
    %v400 = vpop.permute.xlu0 %399
    %401 = vset.pattern.permute.xlu0 0
    %402 = vperm.xlu0 %401, %v376
    %v403 = vpop.permute.xlu0 %402
    %404 = vset.pattern.permute.xlu0 0
    %405 = vperm.xlu0 %404, %v378
    %v406 = vpop.permute.xlu0 %405
    %407 = vset.pattern.permute.xlu0 0
    %408 = vperm.xlu0 %407, %v380
    %v409 = vpop.permute.xlu0 %408
    %410 = vset.pattern.permute.xlu0 0
    %411 = vperm.xlu0 %410, %v382
    %v412 = vpop.permute.xlu0 %411
    %413 = vset.pattern.permute.xlu0 0
    %414 = vperm.xlu0 %413, %v384
    %v415 = vpop.permute.xlu0 %414
    %416 = vset.pattern.permute.xlu0 0
    %417 = vperm.xlu0 %416, %v386
    %v418 = vpop.permute.xlu0 %417
    %v419 = vlaneseq
    %v420 = vshrl.u32 %v419, 7
    %v421 = vsub.s32 %v270, %v420
    %v422 = vrot.slane %v397, %v421
    %v423 = vlaneseq
    %v424 = vshrl.u32 %v423, 7
    %v425 = vsub.s32 %v270, %v424
    %v426 = vrot.slane %v400, %v425
    %v427 = vlaneseq
    %v428 = vshrl.u32 %v427, 7
    %v429 = vsub.s32 %v270, %v428
    %v430 = vrot.slane %v403, %v429
    %v431 = vlaneseq
    %v432 = vshrl.u32 %v431, 7
    %v433 = vsub.s32 %v270, %v432
    %v434 = vrot.slane %v406, %v433
    %v435 = vlaneseq
    %v436 = vshrl.u32 %v435, 7
    %v437 = vsub.s32 %v270, %v436
    %v438 = vrot.slane %v409, %v437
    %v439 = vlaneseq
    %v440 = vshrl.u32 %v439, 7
    %v441 = vsub.s32 %v270, %v440
    %v442 = vrot.slane %v412, %v441
    %v443 = vlaneseq
    %v444 = vshrl.u32 %v443, 7
    %v445 = vsub.s32 %v270, %v444
    %v446 = vrot.slane %v415, %v445
    %v447 = vlaneseq
    %v448 = vshrl.u32 %v447, 7
    %v449 = vsub.s32 %v270, %v448
    %v450 = vrot.slane %v418, %v449
    %v451 = vsel %vm303, %v426, %v422
    %v452 = vsel %vm305, %v430, %v451
    %v453 = vsel %vm307, %v434, %v452
    %v454 = vsel %vm309, %v438, %v453
    %v455 = vsel %vm311, %v442, %v454
    %v456 = vsel %vm313, %v446, %v455
    %v457 = vsel %vm315, %v450, %v456
    %v459 = vsel %vm318, %v457, 0.0
    %460 = vadd.xlane.f32.xlu0 %v459
    %v461 = vpop.xlane.xlu0 %460
    %v463 = vlaneseq
    %v464 = vshrl.u32 %v463, 7
    %v465 = vsub.s32 0, %v464
    %v466 = vrot.slane %v461, %v465
    %v467 = vlaneseq
    %v468 = vshrl.u32 %v467, 7
    %v469 = vsub.s32 1, %v468
    %v470 = vrot.slane %v461, %v469
    %v471 = vlaneseq
    %v472 = vshrl.u32 %v471, 7
    %v473 = vsub.s32 2, %v472
    %v474 = vrot.slane %v461, %v473
    %v475 = vlaneseq
    %v476 = vshrl.u32 %v475, 7
    %v477 = vsub.s32 3, %v476
    %v478 = vrot.slane %v461, %v477
    %v479 = vlaneseq
    %v480 = vshrl.u32 %v479, 7
    %v481 = vsub.s32 4, %v480
    %v482 = vrot.slane %v461, %v481
    %v483 = vlaneseq
    %v484 = vshrl.u32 %v483, 7
    %v485 = vsub.s32 5, %v484
    %v486 = vrot.slane %v461, %v485
    %v487 = vlaneseq
    %v488 = vshrl.u32 %v487, 7
    %v489 = vsub.s32 6, %v488
    %v490 = vrot.slane %v461, %v489
    %v491 = vlaneseq
    %v492 = vshrl.u32 %v491, 7
    %v493 = vsub.s32 7, %v492
    %v494 = vrot.slane %v461, %v493
    %v503 = vrcp.pop %v466
    %v504 = vmul.f32 %v372, %v503
    %v505 = vrcp.pop %v470
    %v506 = vmul.f32 %v374, %v505
    %v507 = vrcp.pop %v474
    %v508 = vmul.f32 %v376, %v507
    %v509 = vrcp.pop %v478
    %v510 = vmul.f32 %v378, %v509
    %v511 = vrcp.pop %v482
    %v512 = vmul.f32 %v380, %v511
    %v513 = vrcp.pop %v486
    %v514 = vmul.f32 %v382, %v513
    %v515 = vrcp.pop %v490
    %v516 = vmul.f32 %v384, %v515
    %v517 = vrcp.pop %v494
    %v518 = vmul.f32 %v386, %v517
    %527 = vset.pattern.permute.xlu0 0
    %528 = vperm.xlu0 %527, %v504
    %v529 = vpop.permute.xlu0 %528
    %530 = vset.pattern.permute.xlu0 0
    %531 = vperm.xlu0 %530, %v506
    %v532 = vpop.permute.xlu0 %531
    %533 = vset.pattern.permute.xlu0 0
    %534 = vperm.xlu0 %533, %v508
    %v535 = vpop.permute.xlu0 %534
    %536 = vset.pattern.permute.xlu0 0
    %537 = vperm.xlu0 %536, %v510
    %v538 = vpop.permute.xlu0 %537
    %539 = vset.pattern.permute.xlu0 0
    %540 = vperm.xlu0 %539, %v512
    %v541 = vpop.permute.xlu0 %540
    %542 = vset.pattern.permute.xlu0 0
    %543 = vperm.xlu0 %542, %v514
    %v544 = vpop.permute.xlu0 %543
    %545 = vset.pattern.permute.xlu0 0
    %546 = vperm.xlu0 %545, %v516
    %v547 = vpop.permute.xlu0 %546
    %548 = vset.pattern.permute.xlu0 0
    %549 = vperm.xlu0 %548, %v518
    %v550 = vpop.permute.xlu0 %549
    %v551 = vlaneseq
    %v552 = vshrl.u32 %v551, 7
    %v553 = vsub.s32 %v270, %v552
    %v554 = vrot.slane %v529, %v553
    %v555 = vlaneseq
    %v556 = vshrl.u32 %v555, 7
    %v557 = vsub.s32 %v270, %v556
    %v558 = vrot.slane %v532, %v557
    %v559 = vlaneseq
    %v560 = vshrl.u32 %v559, 7
    %v561 = vsub.s32 %v270, %v560
    %v562 = vrot.slane %v535, %v561
    %v563 = vlaneseq
    %v564 = vshrl.u32 %v563, 7
    %v565 = vsub.s32 %v270, %v564
    %v566 = vrot.slane %v538, %v565
    %v567 = vlaneseq
    %v568 = vshrl.u32 %v567, 7
    %v569 = vsub.s32 %v270, %v568
    %v570 = vrot.slane %v541, %v569
    %v571 = vlaneseq
    %v572 = vshrl.u32 %v571, 7
    %v573 = vsub.s32 %v270, %v572
    %v574 = vrot.slane %v544, %v573
    %v575 = vlaneseq
    %v576 = vshrl.u32 %v575, 7
    %v577 = vsub.s32 %v270, %v576
    %v578 = vrot.slane %v547, %v577
    %v579 = vlaneseq
    %v580 = vshrl.u32 %v579, 7
    %v581 = vsub.s32 %v270, %v580
    %v582 = vrot.slane %v550, %v581
    %v583 = vsel %vm303, %v558, %v554
    %v584 = vsel %vm305, %v562, %v583
    %v585 = vsel %vm307, %v566, %v584
    %v586 = vsel %vm309, %v570, %v585
    %v587 = vsel %vm311, %v574, %v586
    %v588 = vsel %vm313, %v578, %v587
    %v589 = vsel %vm315, %v582, %v588
    %v591 = vsel %vm318, %v589, 0.0
    %592 = vst [vmem:[#allocation10] sm:$0xff] %v591
    %v593 = vsel %vm318, %v554, 0
    %595 = vmatprep.subr.mxu0 0.0
    %596 = vmatpush1.msra.mxu0 %v67
    %597 = vmatprep.subr.mxu0 0.0
    %598 = vmatpush1.msra.mxu0 0.0
    %599 = vmatprep.subr.mxu0 0.0
    %600 = vmatpush1.msra.mxu0 0.0
    %601 = vmatprep.subr.mxu0 0.0
    %602 = vmatpush1.msra.mxu0 0.0
    %603 = vmatprep.subr.mxu0 0.0
    %604 = vmatpush1.msra.mxu0 0.0
    %605 = vmatprep.subr.mxu0 0.0
    %606 = vmatpush1.msra.mxu0 0.0
    %607 = vmatprep.subr.mxu0 0.0
    %608 = vmatpush1.msra.mxu0 0.0
    %609 = vmatprep.subr.mxu0 0.0
    %610 = vmatpush1.msra.mxu0 0.0
    %611 = vmatprep.subr.mxu0 0.0
    %612 = vmatpush1.msra.mxu0 0.0
    %613 = vmatprep.subr.mxu0 0.0
    %614 = vmatpush1.msra.mxu0 0.0
    %615 = vmatprep.subr.mxu0 0.0
    %616 = vmatpush1.msra.mxu0 0.0
    %617 = vmatprep.subr.mxu0 0.0
    %618 = vmatpush1.msra.mxu0 0.0
    %619 = vmatprep.subr.mxu0 0.0
    %620 = vmatpush1.msra.mxu0 0.0
    %621 = vmatprep.subr.mxu0 0.0
    %622 = vmatpush1.msra.mxu0 0.0
    %623 = vmatprep.subr.mxu0 0.0
    %624 = vmatpush1.msra.mxu0 0.0
    %625 = vmatprep.subr.mxu0 0.0
    %626 = vmatpush1.msra.mxu0 0.0
    %627 = vmatprep.subr.mxu0 0.0
    %628 = vmatpush1.msra.mxu0 0.0
    %629 = vmatprep.subr.mxu0 0.0
    %630 = vmatpush1.msra.mxu0 0.0
    %631 = vmatprep.subr.mxu0 0.0
    %632 = vmatpush1.msra.mxu0 0.0
    %633 = vmatprep.subr.mxu0 0.0
    %634 = vmatpush1.msra.mxu0 0.0
    %635 = vmatprep.subr.mxu0 0.0
    %636 = vmatpush1.msra.mxu0 0.0
    %637 = vmatprep.subr.mxu0 0.0
    %638 = vmatpush1.msra.mxu0 0.0
    %639 = vmatprep.subr.mxu0 0.0
    %640 = vmatpush1.msra.mxu0 0.0
    %641 = vmatprep.subr.mxu0 0.0
    %642 = vmatpush1.msra.mxu0 0.0
    %643 = vmatprep.subr.mxu0 0.0
    %644 = vmatpush1.msra.mxu0 0.0
    %645 = vmatprep.subr.mxu0 0.0
    %646 = vmatpush1.msra.mxu0 0.0
    %647 = vmatprep.subr.mxu0 0.0
    %648 = vmatpush1.msra.mxu0 0.0
    %649 = vmatprep.subr.mxu0 0.0
    %650 = vmatpush1.msra.mxu0 0.0
    %651 = vmatprep.subr.mxu0 0.0
    %652 = vmatpush1.msra.mxu0 0.0
    %653 = vmatprep.subr.mxu0 0.0
    %654 = vmatpush1.msra.mxu0 0.0
    %655 = vmatprep.subr.mxu0 0.0
    %656 = vmatpush1.msra.mxu0 0.0
    %657 = vmatprep.subr.mxu0 0.0
    %658 = vmatpush1.msra.mxu0 0.0
    %659 = vmatprep.mubr.f32.mxu0 0.0
    %660 = vmatmul.mubr.f32.gmra.mrb[0].mxu0 %v593
    %v661 = vpop.f32.mrb[0].mxu0
    %v662 = vadd.f32 0.0, %v661
    %v663 = vpop.f32.mrb[0].mxu0
    %664 = vdwg.mxu0
    %v665 = vsel %vm318, %v558, 0
    %667 = vmatprep.subr.mxu0 0.0
    %668 = vmatpush1.msra.mxu0 %v68
    %669 = vmatprep.subr.mxu0 0.0
    %670 = vmatpush1.msra.mxu0 0.0
    %671 = vmatprep.subr.mxu0 0.0
    %672 = vmatpush1.msra.mxu0 0.0
    %673 = vmatprep.subr.mxu0 0.0
    %674 = vmatpush1.msra.mxu0 0.0
    %675 = vmatprep.subr.mxu0 0.0
    %676 = vmatpush1.msra.mxu0 0.0
    %677 = vmatprep.subr.mxu0 0.0
    %678 = vmatpush1.msra.mxu0 0.0
    %679 = vmatprep.subr.mxu0 0.0
    %680 = vmatpush1.msra.mxu0 0.0
    %681 = vmatprep.subr.mxu0 0.0
    %682 = vmatpush1.msra.mxu0 0.0
    %683 = vmatprep.subr.mxu0 0.0
    %684 = vmatpush1.msra.mxu0 0.0
    %685 = vmatprep.subr.mxu0 0.0
    %686 = vmatpush1.msra.mxu0 0.0
    %687 = vmatprep.subr.mxu0 0.0
    %688 = vmatpush1.msra.mxu0 0.0
    %689 = vmatprep.subr.mxu0 0.0
    %690 = vmatpush1.msra.mxu0 0.0
    %691 = vmatprep.subr.mxu0 0.0
    %692 = vmatpush1.msra.mxu0 0.0
    %693 = vmatprep.subr.mxu0 0.0
    %694 = vmatpush1.msra.mxu0 0.0
    %695 = vmatprep.subr.mxu0 0.0
    %696 = vmatpush1.msra.mxu0 0.0
    %697 = vmatprep.subr.mxu0 0.0
    %698 = vmatpush1.msra.mxu0 0.0
    %699 = vmatprep.subr.mxu0 0.0
    %700 = vmatpush1.msra.mxu0 0.0
    %701 = vmatprep.subr.mxu0 0.0
    %702 = vmatpush1.msra.mxu0 0.0
    %703 = vmatprep.subr.mxu0 0.0
    %704 = vmatpush1.msra.mxu0 0.0
    %705 = vmatprep.subr.mxu0 0.0
    %706 = vmatpush1.msra.mxu0 0.0
    %707 = vmatprep.subr.mxu0 0.0
    %708 = vmatpush1.msra.mxu0 0.0
    %709 = vmatprep.subr.mxu0 0.0
    %710 = vmatpush1.msra.mxu0 0.0
    %711 = vmatprep.subr.mxu0 0.0
    %712 = vmatpush1.msra.mxu0 0.0
    %713 = vmatprep.subr.mxu0 0.0
    %714 = vmatpush1.msra.mxu0 0.0
    %715 = vmatprep.subr.mxu0 0.0
    %716 = vmatpush1.msra.mxu0 0.0
    %717 = vmatprep.subr.mxu0 0.0
    %718 = vmatpush1.msra.mxu0 0.0
    %719 = vmatprep.subr.mxu0 0.0
    %720 = vmatpush1.msra.mxu0 0.0
    %721 = vmatprep.subr.mxu0 0.0
    %722 = vmatpush1.msra.mxu0 0.0
    %723 = vmatprep.subr.mxu0 0.0
    %724 = vmatpush1.msra.mxu0 0.0
    %725 = vmatprep.subr.mxu0 0.0
    %726 = vmatpush1.msra.mxu0 0.0
    %727 = vmatprep.subr.mxu0 0.0
    %728 = vmatpush1.msra.mxu0 0.0
    %729 = vmatprep.subr.mxu0 0.0
    %730 = vmatpush1.msra.mxu0 0.0
    %731 = vmatprep.mubr.f32.mxu0 0.0
    %732 = vmatmul.mubr.f32.gmra.mrb[0].mxu0 %v665
    %v733 = vpop.f32.mrb[0].mxu0
    %v734 = vadd.f32 0.0, %v733
    %v735 = vpop.f32.mrb[0].mxu0
    %736 = vdwg.mxu0
    %v737 = vsel %vm318, %v562, 0
    %739 = vmatprep.subr.mxu0 0.0
    %740 = vmatpush1.msra.mxu0 %v69
    %741 = vmatprep.subr.mxu0 0.0
    %742 = vmatpush1.msra.mxu0 0.0
    %743 = vmatprep.subr.mxu0 0.0
    %744 = vmatpush1.msra.mxu0 0.0
    %745 = vmatprep.subr.mxu0 0.0
    %746 = vmatpush1.msra.mxu0 0.0
    %747 = vmatprep.subr.mxu0 0.0
    %748 = vmatpush1.msra.mxu0 0.0
    %749 = vmatprep.subr.mxu0 0.0
    %750 = vmatpush1.msra.mxu0 0.0
    %751 = vmatprep.subr.mxu0 0.0
    %752 = vmatpush1.msra.mxu0 0.0
    %753 = vmatprep.subr.mxu0 0.0
    %754 = vmatpush1.msra.mxu0 0.0
    %755 = vmatprep.subr.mxu0 0.0
    %756 = vmatpush1.msra.mxu0 0.0
    %757 = vmatprep.subr.mxu0 0.0
    %758 = vmatpush1.msra.mxu0 0.0
    %759 = vmatprep.subr.mxu0 0.0
    %760 = vmatpush1.msra.mxu0 0.0
    %761 = vmatprep.subr.mxu0 0.0
    %762 = vmatpush1.msra.mxu0 0.0
    %763 = vmatprep.subr.mxu0 0.0
    %764 = vmatpush1.msra.mxu0 0.0
    %765 = vmatprep.subr.mxu0 0.0
    %766 = vmatpush1.msra.mxu0 0.0
    %767 = vmatprep.subr.mxu0 0.0
    %768 = vmatpush1.msra.mxu0 0.0
    %769 = vmatprep.subr.mxu0 0.0
    %770 = vmatpush1.msra.mxu0 0.0
    %771 = vmatprep.subr.mxu0 0.0
    %772 = vmatpush1.msra.mxu0 0.0
    %773 = vmatprep.subr.mxu0 0.0
    %774 = vmatpush1.msra.mxu0 0.0
    %775 = vmatprep.subr.mxu0 0.0
    %776 = vmatpush1.msra.mxu0 0.0
    %777 = vmatprep.subr.mxu0 0.0
    %778 = vmatpush1.msra.mxu0 0.0
    %779 = vmatprep.subr.mxu0 0.0
    %780 = vmatpush1.msra.mxu0 0.0
    %781 = vmatprep.subr.mxu0 0.0
    %782 = vmatpush1.msra.mxu0 0.0
    %783 = vmatprep.subr.mxu0 0.0
    %784 = vmatpush1.msra.mxu0 0.0
    %785 = vmatprep.subr.mxu0 0.0
    %786 = vmatpush1.msra.mxu0 0.0
    %787 = vmatprep.subr.mxu0 0.0
    %788 = vmatpush1.msra.mxu0 0.0
    %789 = vmatprep.subr.mxu0 0.0
    %790 = vmatpush1.msra.mxu0 0.0
    %791 = vmatprep.subr.mxu0 0.0
    %792 = vmatpush1.msra.mxu0 0.0
    %793 = vmatprep.subr.mxu0 0.0
    %794 = vmatpush1.msra.mxu0 0.0
    %795 = vmatprep.subr.mxu0 0.0
    %796 = vmatpush1.msra.mxu0 0.0
    %797 = vmatprep.subr.mxu0 0.0
    %798 = vmatpush1.msra.mxu0 0.0
    %799 = vmatprep.subr.mxu0 0.0
    %800 = vmatpush1.msra.mxu0 0.0
    %801 = vmatprep.subr.mxu0 0.0
    %802 = vmatpush1.msra.mxu0 0.0
    %803 = vmatprep.mubr.f32.mxu0 0.0
    %804 = vmatmul.mubr.f32.gmra.mrb[0].mxu0 %v737
    %v805 = vpop.f32.mrb[0].mxu0
    %v806 = vadd.f32 0.0, %v805
    %v807 = vpop.f32.mrb[0].mxu0
    %808 = vdwg.mxu0
    %v809 = vsel %vm318, %v566, 0
    %811 = vmatprep.subr.mxu0 0.0
    %812 = vmatpush1.msra.mxu0 %v70
    %813 = vmatprep.subr.mxu0 0.0
    %814 = vmatpush1.msra.mxu0 0.0
    %815 = vmatprep.subr.mxu0 0.0
    %816 = vmatpush1.msra.mxu0 0.0
    %817 = vmatprep.subr.mxu0 0.0
    %818 = vmatpush1.msra.mxu0 0.0
    %819 = vmatprep.subr.mxu0 0.0
    %820 = vmatpush1.msra.mxu0 0.0
    %821 = vmatprep.subr.mxu0 0.0
    %822 = vmatpush1.msra.mxu0 0.0
    %823 = vmatprep.subr.mxu0 0.0
    %824 = vmatpush1.msra.mxu0 0.0
    %825 = vmatprep.subr.mxu0 0.0
    %826 = vmatpush1.msra.mxu0 0.0
    %827 = vmatprep.subr.mxu0 0.0
    %828 = vmatpush1.msra.mxu0 0.0
    %829 = vmatprep.subr.mxu0 0.0
    %830 = vmatpush1.msra.mxu0 0.0
    %831 = vmatprep.subr.mxu0 0.0
    %832 = vmatpush1.msra.mxu0 0.0
    %833 = vmatprep.subr.mxu0 0.0
    %834 = vmatpush1.msra.mxu0 0.0
    %835 = vmatprep.subr.mxu0 0.0
    %836 = vmatpush1.msra.mxu0 0.0
    %837 = vmatprep.subr.mxu0 0.0
    %838 = vmatpush1.msra.mxu0 0.0
    %839 = vmatprep.subr.mxu0 0.0
    %840 = vmatpush1.msra.mxu0 0.0
    %841 = vmatprep.subr.mxu0 0.0
    %842 = vmatpush1.msra.mxu0 0.0
    %843 = vmatprep.subr.mxu0 0.0
    %844 = vmatpush1.msra.mxu0 0.0
    %845 = vmatprep.subr.mxu0 0.0
    %846 = vmatpush1.msra.mxu0 0.0
    %847 = vmatprep.subr.mxu0 0.0
    %848 = vmatpush1.msra.mxu0 0.0
    %849 = vmatprep.subr.mxu0 0.0
    %850 = vmatpush1.msra.mxu0 0.0
    %851 = vmatprep.subr.mxu0 0.0
    %852 = vmatpush1.msra.mxu0 0.0
    %853 = vmatprep.subr.mxu0 0.0
    %854 = vmatpush1.msra.mxu0 0.0
    %855 = vmatprep.subr.mxu0 0.0
    %856 = vmatpush1.msra.mxu0 0.0
    %857 = vmatprep.subr.mxu0 0.0
    %858 = vmatpush1.msra.mxu0 0.0
    %859 = vmatprep.subr.mxu0 0.0
    %860 = vmatpush1.msra.mxu0 0.0
    %861 = vmatprep.subr.mxu0 0.0
    %862 = vmatpush1.msra.mxu0 0.0
    %863 = vmatprep.subr.mxu0 0.0
    %864 = vmatpush1.msra.mxu0 0.0
    %865 = vmatprep.subr.mxu0 0.0
    %866 = vmatpush1.msra.mxu0 0.0
    %867 = vmatprep.subr.mxu0 0.0
    %868 = vmatpush1.msra.mxu0 0.0
    %869 = vmatprep.subr.mxu0 0.0
    %870 = vmatpush1.msra.mxu0 0.0
    %871 = vmatprep.subr.mxu0 0.0
    %872 = vmatpush1.msra.mxu0 0.0
    %873 = vmatprep.subr.mxu0 0.0
    %874 = vmatpush1.msra.mxu0 0.0
    %875 = vmatprep.mubr.f32.mxu0 0.0
    %876 = vmatmul.mubr.f32.gmra.mrb[0].mxu0 %v809
    %v877 = vpop.f32.mrb[0].mxu0
    %v878 = vadd.f32 0.0, %v877
    %v879 = vpop.f32.mrb[0].mxu0
    %880 = vdwg.mxu0
    %v881 = vsel %vm318, %v570, 0
    %883 = vmatprep.subr.mxu0 0.0
    %884 = vmatpush1.msra.mxu0 %v71
    %885 = vmatprep.subr.mxu0 0.0
    %886 = vmatpush1.msra.mxu0 0.0
    %887 = vmatprep.subr.mxu0 0.0
    %888 = vmatpush1.msra.mxu0 0.0
    %889 = vmatprep.subr.mxu0 0.0
    %890 = vmatpush1.msra.mxu0 0.0
    %891 = vmatprep.subr.mxu0 0.0
    %892 = vmatpush1.msra.mxu0 0.0
    %893 = vmatprep.subr.mxu0 0.0
    %894 = vmatpush1.msra.mxu0 0.0
    %895 = vmatprep.subr.mxu0 0.0
    %896 = vmatpush1.msra.mxu0 0.0
    %897 = vmatprep.subr.mxu0 0.0
    %898 = vmatpush1.msra.mxu0 0.0
    %899 = vmatprep.subr.mxu0 0.0
    %900 = vmatpush1.msra.mxu0 0.0
    %901 = vmatprep.subr.mxu0 0.0
    %902 = vmatpush1.msra.mxu0 0.0
    %903 = vmatprep.subr.mxu0 0.0
    %904 = vmatpush1.msra.mxu0 0.0
    %905 = vmatprep.subr.mxu0 0.0
    %906 = vmatpush1.msra.mxu0 0.0
    %907 = vmatprep.subr.mxu0 0.0
    %908 = vmatpush1.msra.mxu0 0.0
    %909 = vmatprep.subr.mxu0 0.0
    %910 = vmatpush1.msra.mxu0 0.0
    %911 = vmatprep.subr.mxu0 0.0
    %912 = vmatpush1.msra.mxu0 0.0
    %913 = vmatprep.subr.mxu0 0.0
    %914 = vmatpush1.msra.mxu0 0.0
    %915 = vmatprep.subr.mxu0 0.0
    %916 = vmatpush1.msra.mxu0 0.0
    %917 = vmatprep.subr.mxu0 0.0
    %918 = vmatpush1.msra.mxu0 0.0
    %919 = vmatprep.subr.mxu0 0.0
    %920 = vmatpush1.msra.mxu0 0.0
    %921 = vmatprep.subr.mxu0 0.0
    %922 = vmatpush1.msra.mxu0 0.0
    %923 = vmatprep.subr.mxu0 0.0
    %924 = vmatpush1.msra.mxu0 0.0
    %925 = vmatprep.subr.mxu0 0.0
    %926 = vmatpush1.msra.mxu0 0.0
    %927 = vmatprep.subr.mxu0 0.0
    %928 = vmatpush1.msra.mxu0 0.0
    %929 = vmatprep.subr.mxu0 0.0
    %930 = vmatpush1.msra.mxu0 0.0
    %931 = vmatprep.subr.mxu0 0.0
    %932 = vmatpush1.msra.mxu0 0.0
    %933 = vmatprep.subr.mxu0 0.0
    %934 = vmatpush1.msra.mxu0 0.0
    %935 = vmatprep.subr.mxu0 0.0
    %936 = vmatpush1.msra.mxu0 0.0
    %937 = vmatprep.subr.mxu0 0.0
    %938 = vmatpush1.msra.mxu0 0.0
    %939 = vmatprep.subr.mxu0 0.0
    %940 = vmatpush1.msra.mxu0 0.0
    %941 = vmatprep.subr.mxu0 0.0
    %942 = vmatpush1.msra.mxu0 0.0
    %943 = vmatprep.subr.mxu0 0.0
    %944 = vmatpush1.msra.mxu0 0.0
    %945 = vmatprep.subr.mxu0 0.0
    %946 = vmatpush1.msra.mxu0 0.0
    %947 = vmatprep.mubr.f32.mxu0 0.0
    %948 = vmatmul.mubr.f32.gmra.mrb[0].mxu0 %v881
    %v949 = vpop.f32.mrb[0].mxu0
    %v950 = vadd.f32 0.0, %v949
    %v951 = vpop.f32.mrb[0].mxu0
    %952 = vdwg.mxu0
    %v953 = vsel %vm318, %v574, 0
    %955 = vmatprep.subr.mxu0 0.0
    %956 = vmatpush1.msra.mxu0 %v72
    %957 = vmatprep.subr.mxu0 0.0
    %958 = vmatpush1.msra.mxu0 0.0
    %959 = vmatprep.subr.mxu0 0.0
    %960 = vmatpush1.msra.mxu0 0.0
    %961 = vmatprep.subr.mxu0 0.0
    %962 = vmatpush1.msra.mxu0 0.0
    %963 = vmatprep.subr.mxu0 0.0
    %964 = vmatpush1.msra.mxu0 0.0
    %965 = vmatprep.subr.mxu0 0.0
    %966 = vmatpush1.msra.mxu0 0.0
    %967 = vmatprep.subr.mxu0 0.0
    %968 = vmatpush1.msra.mxu0 0.0
    %969 = vmatprep.subr.mxu0 0.0
    %970 = vmatpush1.msra.mxu0 0.0
    %971 = vmatprep.subr.mxu0 0.0
    %972 = vmatpush1.msra.mxu0 0.0
    %973 = vmatprep.subr.mxu0 0.0
    %974 = vmatpush1.msra.mxu0 0.0
    %975 = vmatprep.subr.mxu0 0.0
    %976 = vmatpush1.msra.mxu0 0.0
    %977 = vmatprep.subr.mxu0 0.0
    %978 = vmatpush1.msra.mxu0 0.0
    %979 = vmatprep.subr.mxu0 0.0
    %980 = vmatpush1.msra.mxu0 0.0
    %981 = vmatprep.subr.mxu0 0.0
    %982 = vmatpush1.msra.mxu0 0.0
    %983 = vmatprep.subr.mxu0 0.0
    %984 = vmatpush1.msra.mxu0 0.0
    %985 = vmatprep.subr.mxu0 0.0
    %986 = vmatpush1.msra.mxu0 0.0
    %987 = vmatprep.subr.mxu0 0.0
    %988 = vmatpush1.msra.mxu0 0.0
    %989 = vmatprep.subr.mxu0 0.0
    %990 = vmatpush1.msra.mxu0 0.0
    %991 = vmatprep.subr.mxu0 0.0
    %992 = vmatpush1.msra.mxu0 0.0
    %993 = vmatprep.subr.mxu0 0.0
    %994 = vmatpush1.msra.mxu0 0.0
    %995 = vmatprep.subr.mxu0 0.0
    %996 = vmatpush1.msra.mxu0 0.0
    %997 = vmatprep.subr.mxu0 0.0
    %998 = vmatpush1.msra.mxu0 0.0
    %999 = vmatprep.subr.mxu0 0.0
    %1000 = vmatpush1.msra.mxu0 0.0
    %1001 = vmatprep.subr.mxu0 0.0
    %1002 = vmatpush1.msra.mxu0 0.0
    %1003 = vmatprep.subr.mxu0 0.0
    %1004 = vmatpush1.msra.mxu0 0.0
    %1005 = vmatprep.subr.mxu0 0.0
    %1006 = vmatpush1.msra.mxu0 0.0
    %1007 = vmatprep.subr.mxu0 0.0
    %1008 = vmatpush1.msra.mxu0 0.0
    %1009 = vmatprep.subr.mxu0 0.0
    %1010 = vmatpush1.msra.mxu0 0.0
    %1011 = vmatprep.subr.mxu0 0.0
    %1012 = vmatpush1.msra.mxu0 0.0
    %1013 = vmatprep.subr.mxu0 0.0
    %1014 = vmatpush1.msra.mxu0 0.0
    %1015 = vmatprep.subr.mxu0 0.0
    %1016 = vmatpush1.msra.mxu0 0.0
    %1017 = vmatprep.subr.mxu0 0.0
    %1018 = vmatpush1.msra.mxu0 0.0
    %1019 = vmatprep.mubr.f32.mxu0 0.0
    %1020 = vmatmul.mubr.f32.gmra.mrb[0].mxu0 %v953
    %v1021 = vpop.f32.mrb[0].mxu0
    %v1022 = vadd.f32 0.0, %v1021
    %v1023 = vpop.f32.mrb[0].mxu0
    %1024 = vdwg.mxu0
    %v1025 = vsel %vm318, %v578, 0
    %1027 = vmatprep.subr.mxu0 0.0
    %1028 = vmatpush1.msra.mxu0 %v73
    %1029 = vmatprep.subr.mxu0 0.0
    %1030 = vmatpush1.msra.mxu0 0.0
    %1031 = vmatprep.subr.mxu0 0.0
    %1032 = vmatpush1.msra.mxu0 0.0
    %1033 = vmatprep.subr.mxu0 0.0
    %1034 = vmatpush1.msra.mxu0 0.0
    %1035 = vmatprep.subr.mxu0 0.0
    %1036 = vmatpush1.msra.mxu0 0.0
    %1037 = vmatprep.subr.mxu0 0.0
    %1038 = vmatpush1.msra.mxu0 0.0
    %1039 = vmatprep.subr.mxu0 0.0
    %1040 = vmatpush1.msra.mxu0 0.0
    %1041 = vmatprep.subr.mxu0 0.0
    %1042 = vmatpush1.msra.mxu0 0.0
    %1043 = vmatprep.subr.mxu0 0.0
    %1044 = vmatpush1.msra.mxu0 0.0
    %1045 = vmatprep.subr.mxu0 0.0
    %1046 = vmatpush1.msra.mxu0 0.0
    %1047 = vmatprep.subr.mxu0 0.0
    %1048 = vmatpush1.msra.mxu0 0.0
    %1049 = vmatprep.subr.mxu0 0.0
    %1050 = vmatpush1.msra.mxu0 0.0
    %1051 = vmatprep.subr.mxu0 0.0
    %1052 = vmatpush1.msra.mxu0 0.0
    %1053 = vmatprep.subr.mxu0 0.0
    %1054 = vmatpush1.msra.mxu0 0.0
    %1055 = vmatprep.subr.mxu0 0.0
    %1056 = vmatpush1.msra.mxu0 0.0
    %1057 = vmatprep.subr.mxu0 0.0
    %1058 = vmatpush1.msra.mxu0 0.0
    %1059 = vmatprep.subr.mxu0 0.0
    %1060 = vmatpush1.msra.mxu0 0.0
    %1061 = vmatprep.subr.mxu0 0.0
    %1062 = vmatpush1.msra.mxu0 0.0
    %1063 = vmatprep.subr.mxu0 0.0
    %1064 = vmatpush1.msra.mxu0 0.0
    %1065 = vmatprep.subr.mxu0 0.0
    %1066 = vmatpush1.msra.mxu0 0.0
    %1067 = vmatprep.subr.mxu0 0.0
    %1068 = vmatpush1.msra.mxu0 0.0
    %1069 = vmatprep.subr.mxu0 0.0
    %1070 = vmatpush1.msra.mxu0 0.0
    %1071 = vmatprep.subr.mxu0 0.0
    %1072 = vmatpush1.msra.mxu0 0.0
    %1073 = vmatprep.subr.mxu0 0.0
    %1074 = vmatpush1.msra.mxu0 0.0
    %1075 = vmatprep.subr.mxu0 0.0
    %1076 = vmatpush1.msra.mxu0 0.0
    %1077 = vmatprep.subr.mxu0 0.0
    %1078 = vmatpush1.msra.mxu0 0.0
    %1079 = vmatprep.subr.mxu0 0.0
    %1080 = vmatpush1.msra.mxu0 0.0
    %1081 = vmatprep.subr.mxu0 0.0
    %1082 = vmatpush1.msra.mxu0 0.0
    %1083 = vmatprep.subr.mxu0 0.0
    %1084 = vmatpush1.msra.mxu0 0.0
    %1085 = vmatprep.subr.mxu0 0.0
    %1086 = vmatpush1.msra.mxu0 0.0
    %1087 = vmatprep.subr.mxu0 0.0
    %1088 = vmatpush1.msra.mxu0 0.0
    %1089 = vmatprep.subr.mxu0 0.0
    %1090 = vmatpush1.msra.mxu0 0.0
    %1091 = vmatprep.mubr.f32.mxu0 0.0
    %1092 = vmatmul.mubr.f32.gmra.mrb[0].mxu0 %v1025
    %v1093 = vpop.f32.mrb[0].mxu0
    %v1094 = vadd.f32 0.0, %v1093
    %v1095 = vpop.f32.mrb[0].mxu0
    %1096 = vdwg.mxu0
    %v1097 = vsel %vm318, %v582, 0
    %1099 = vmatprep.subr.mxu0 0.0
    %1100 = vmatpush1.msra.mxu0 %v74
    %1101 = vmatprep.subr.mxu0 0.0
    %1102 = vmatpush1.msra.mxu0 0.0
    %1103 = vmatprep.subr.mxu0 0.0
    %1104 = vmatpush1.msra.mxu0 0.0
    %1105 = vmatprep.subr.mxu0 0.0
    %1106 = vmatpush1.msra.mxu0 0.0
    %1107 = vmatprep.subr.mxu0 0.0
    %1108 = vmatpush1.msra.mxu0 0.0
    %1109 = vmatprep.subr.mxu0 0.0
    %1110 = vmatpush1.msra.mxu0 0.0
    %1111 = vmatprep.subr.mxu0 0.0
    %1112 = vmatpush1.msra.mxu0 0.0
    %1113 = vmatprep.subr.mxu0 0.0
    %1114 = vmatpush1.msra.mxu0 0.0
    %1115 = vmatprep.subr.mxu0 0.0
    %1116 = vmatpush1.msra.mxu0 0.0
    %1117 = vmatprep.subr.mxu0 0.0
    %1118 = vmatpush1.msra.mxu0 0.0
    %1119 = vmatprep.subr.mxu0 0.0
    %1120 = vmatpush1.msra.mxu0 0.0
    %1121 = vmatprep.subr.mxu0 0.0
    %1122 = vmatpush1.msra.mxu0 0.0
    %1123 = vmatprep.subr.mxu0 0.0
    %1124 = vmatpush1.msra.mxu0 0.0
    %1125 = vmatprep.subr.mxu0 0.0
    %1126 = vmatpush1.msra.mxu0 0.0
    %1127 = vmatprep.subr.mxu0 0.0
    %1128 = vmatpush1.msra.mxu0 0.0
    %1129 = vmatprep.subr.mxu0 0.0
    %1130 = vmatpush1.msra.mxu0 0.0
    %1131 = vmatprep.subr.mxu0 0.0
    %1132 = vmatpush1.msra.mxu0 0.0
    %1133 = vmatprep.subr.mxu0 0.0
    %1134 = vmatpush1.msra.mxu0 0.0
    %1135 = vmatprep.subr.mxu0 0.0
    %1136 = vmatpush1.msra.mxu0 0.0
    %1137 = vmatprep.subr.mxu0 0.0
    %1138 = vmatpush1.msra.mxu0 0.0
    %1139 = vmatprep.subr.mxu0 0.0
    %1140 = vmatpush1.msra.mxu0 0.0
    %1141 = vmatprep.subr.mxu0 0.0
    %1142 = vmatpush1.msra.mxu0 0.0
    %1143 = vmatprep.subr.mxu0 0.0
    %1144 = vmatpush1.msra.mxu0 0.0
    %1145 = vmatprep.subr.mxu0 0.0
    %1146 = vmatpush1.msra.mxu0 0.0
    %1147 = vmatprep.subr.mxu0 0.0
    %1148 = vmatpush1.msra.mxu0 0.0
    %1149 = vmatprep.subr.mxu0 0.0
    %1150 = vmatpush1.msra.mxu0 0.0
    %1151 = vmatprep.subr.mxu0 0.0
    %1152 = vmatpush1.msra.mxu0 0.0
    %1153 = vmatprep.subr.mxu0 0.0
    %1154 = vmatpush1.msra.mxu0 0.0
    %1155 = vmatprep.subr.mxu0 0.0
    %1156 = vmatpush1.msra.mxu0 0.0
    %1157 = vmatprep.subr.mxu0 0.0
    %1158 = vmatpush1.msra.mxu0 0.0
    %1159 = vmatprep.subr.mxu0 0.0
    %1160 = vmatpush1.msra.mxu0 0.0
    %1161 = vmatprep.subr.mxu0 0.0
    %1162 = vmatpush1.msra.mxu0 0.0
    %1163 = vmatprep.mubr.f32.mxu0 0.0
    %1164 = vmatmul.mubr.f32.gmra.mrb[0].mxu0 %v1097
    %v1165 = vpop.f32.mrb[0].mxu0
    %v1166 = vadd.f32 0.0, %v1165
    %v1167 = vpop.f32.mrb[0].mxu0
    %1168 = vdwg.mxu0
    %v1177 = vrot.slane %v734, 7
    %v1178 = vsel %vm303, %v1177, %v662
    %v1179 = vrot.slane %v806, 6
    %v1180 = vsel %vm305, %v1179, %v1178
    %v1181 = vrot.slane %v878, 5
    %v1182 = vsel %vm307, %v1181, %v1180
    %v1183 = vrot.slane %v950, 4
    %v1184 = vsel %vm309, %v1183, %v1182
    %v1185 = vrot.slane %v1022, 3
    %v1186 = vsel %vm311, %v1185, %v1184
    %v1187 = vrot.slane %v1094, 2
    %v1188 = vsel %vm313, %v1187, %v1186
    %v1189 = vrot.slane %v1166, 1
    %v1190 = vsel %vm315, %v1189, %v1188
    %1192 = vst [vmem:[#allocation9] sm:$0xff] %v1190
    // Predicated region
    $region38: #{tpu_custom_call.1} parent=1 // pred_check
      _
    $region39: #{tpu_custom_call.1} parent=1 // pred_check_branch
      %1194 = sbr.rel (0) target = $region41
    $region40: #{tpu_custom_call.1} parent=1 // pred_region
      %s1196 = ssub.s32 128, 128
      %1197 = vsyncadd [#allocation5], %s1196
      %s1199 = sshll.u32 [#allocation9], 4
      %s1200 = int_to_ptr.vmem [resolvable:$true] %s1199
      %1202 = dma.vmem_to_hbm [thread:$0]  %s1200, 128, %s6, [#allocation5]
    $region41: #{tpu_custom_call.1} parent=1 // pred_fallthru
      _
    // Predicated region
    $region42: #{tpu_custom_call.1} parent=1 // pred_check
      _
    $region43: #{tpu_custom_call.1} parent=1 // pred_check_branch
      %1204 = sbr.rel (0) target = $region45
    $region44: #{tpu_custom_call.1} parent=1 // pred_region
      %s1206 = ssub.s32 128, 128
      %1207 = vsyncadd [#allocation11], %s1206
      %s1209 = sshll.u32 [#allocation10], 4
      %s1210 = int_to_ptr.vmem [resolvable:$true] %s1209
      %1212 = dma.vmem_to_hbm [thread:$0]  %s1210, 128, %s7, [#allocation11]
    $region45: #{tpu_custom_call.1} parent=1 // pred_fallthru
      _
    // Predicated region
    $region46: #{tpu_custom_call.1} parent=1 // pred_check
      _
    $region47: #{tpu_custom_call.1} parent=1 // pred_check_branch
      %1214 = sbr.rel (0) target = $region49
    $region48: #{tpu_custom_call.1} parent=1 // pred_region
      %1215 = dma.done [#allocation5], 128
    $region49: #{tpu_custom_call.1} parent=1 // pred_fallthru
      _
    // Predicated region
    $region50: #{tpu_custom_call.1} parent=1 // pred_check
      _
    $region51: #{tpu_custom_call.1} parent=1 // pred_check_branch
      %1217 = sbr.rel (0) target = $region53
    $region52: #{tpu_custom_call.1} parent=1 // pred_region
      %1218 = dma.done [#allocation11], 128
    $region53: #{tpu_custom_call.1} parent=1 // pred_fallthru
      _
    %1219 = vsyncpa [#allocation4], 1
    %1220 = vsyncpa [#allocation7], 1
    %1221 = vsyncpa [#allocation5], 1
    %1222 = vsyncpa [#allocation11], 1

</llo_original>
